<compile_context>
chip_gen: v5e
topology: v5e:2x2
jax: 0.10.0
libtpu: 0.0.40
codegen_flags: <defaults>
</compile_context>

<pallas_src>
import jax
import jax.numpy as jnp
import numpy as np
from jax.experimental import pallas as pl
from jax.experimental.pallas import tpu as pltpu

KH, KW = 3, 3  # kernel_size=3
PAD = 1        # padding=1 (stride=1)


def _conv_kernel(xcol_ref, w_ref, b_ref, o_ref):
    """One batch tile per grid step.

    xcol_ref: (Bt, 9*C, L)  im2col patches (bf16), L = H*W on the lane axis
    w_ref   : (O, 9*C)      packed weights (bf16)
    b_ref   : (O, 1)        bias (f32)
    o_ref   : (Bt, O, L)    output tile (f32), already NC(HW) ordered
    """
    bt = xcol_ref.shape[0]
    w = w_ref[...]          # (O, 9C)
    b = b_ref[...]          # (O, 1) -> lane-broadcast in the add below
    for i in range(bt):     # static unroll over the (small) batch tile
        # Single K=9C matmul on the MXU, f32 accumulation, lane-dense output.
        acc = jnp.dot(w, xcol_ref[i], preferred_element_type=jnp.float32)
        o_ref[i] = (acc + b).astype(o_ref.dtype)


def _pick_batch_tile(n, c9, l, o):
    """Largest divisor of n that keeps the per-step blocks modest (~2 MiB)
    while leaving >= 2 grid steps when n >= 2 (v7x megacore)."""
    bytes_per_img = c9 * l * 2 + o * l * 4  # bf16 input block + f32 output block
    budget = 2 * 1024 * 1024
    bt = max(1, min(n, budget // max(bytes_per_img, 1)))
    while n % bt:
        bt -= 1
    if n >= 2 and n // bt < 2:
        bt = max(1, n // 2)
        while n % bt:
            bt -= 1
    return bt


def conv_forward(x_nchw, weight, bias, *, compute_dtype=jnp.bfloat16):
    """Conv(in_ch, out_ch, 3, stride=1, padding=1) forward.

    x_nchw : (N, C, H, W)  float32
    weight : (O, C, 3, 3)  float32   (PyTorch Conv2d layout)
    bias   : (O,)          float32
    returns (N, O, H, W)   float32
    """
    N, C, H, W = x_nchw.shape
    O = weight.shape[0]
    L = H * W
    C9 = KH * KW * C

    # --- XLA glue: im2col in NCHW-native order (one fused pad/slice/stack). ---
    x_pad = jnp.pad(x_nchw, ((0, 0), (0, 0), (PAD, PAD), (PAD, PAD)))
    taps = [x_pad[:, :, kh:kh + H, kw:kw + W]
            for kh in range(KH) for kw in range(KW)]            # 9 x (N,C,H,W)
    xcol = jnp.stack(taps, axis=1).reshape(N, C9, L)            # (N, 9C, H*W)
    xcol = xcol.astype(compute_dtype)

    # Weights packed to (O, 9C) with the same (tap-major, then channel) row
    # order as xcol: w_mat[o, (kh*3+kw)*C + c] = weight[o, c, kh, kw].
    w_mat = jnp.transpose(weight, (0, 2, 3, 1)).reshape(O, C9).astype(compute_dtype)
    b_col = bias.reshape(O, 1).astype(jnp.float32)

    bt = _pick_batch_tile(N, C9, L, O)

    out = pl.pallas_call(
        _conv_kernel,
        out_shape=jax.ShapeDtypeStruct((N, O, L), jnp.float32),
        grid_spec=pltpu.PrefetchScalarGridSpec(
            num_scalar_prefetch=0,
            grid=(N // bt,),
            in_specs=[
                pl.BlockSpec((bt, C9, L), lambda n: (n, 0, 0)),
                pl.BlockSpec((O, C9), lambda n: (0, 0)),
                pl.BlockSpec((O, 1), lambda n: (0, 0)),
            ],
            out_specs=pl.BlockSpec((bt, O, L), lambda n: (n, 0, 0)),
        ),
        compiler_params=pltpu.CompilerParams(
            dimension_semantics=("parallel",)),
    )(xcol, w_mat, b_col)

    # Free contiguous reshape: (N, O, H*W) -> (N, O, H, W). No transpose.
    return out.reshape(N, O, H, W)


def _reference(x_nchw, weight, bias, precision=None):
    # Pure-JAX reference (same semantics as nn.Conv2d stride=1, padding=1).
    out = jax.lax.conv_general_dilated(
        x_nchw, weight, window_strides=(1, 1),
        padding=((PAD, PAD), (PAD, PAD)),
        dimension_numbers=("NCHW", "OIHW", "NCHW"),
        precision=precision)
    return out + bias[None, :, None, None]


if __name__ == "__main__":
    # Module hyperparameters (Conv(in_channels=4, out_channels=8)).
    N, C, H, W = 2, 4, 16, 16
    O = 8

    key = jax.random.PRNGKey(0)
    k1, k2, k3 = jax.random.split(key, 3)
    x = jax.random.normal(k1, (N, C, H, W), dtype=jnp.float32)
    weight = jax.random.normal(k2, (O, C, KH, KW), dtype=jnp.float32) * 0.1
    bias = jax.random.normal(k3, (O,), dtype=jnp.float32) * 0.1

    out = jax.block_until_ready(conv_forward(x, weight, bias))
    assert out.shape == (N, O, H, W)

    # Tight check against a reference fed with the same bf16-rounded operands
    # (kernel accumulates in f32, so this isolates layout/indexing bugs).
    x_r = x.astype(jnp.bfloat16).astype(jnp.float32)
    w_r = weight.astype(jnp.bfloat16).astype(jnp.float32)
    ref_bf16_inputs = jax.block_until_ready(
        _reference(x_r, w_r, bias, precision=jax.lax.Precision.HIGHEST))
    np.testing.assert_allclose(np.asarray(out), np.asarray(ref_bf16_inputs),
                               rtol=1e-3, atol=1e-3)

    # Loose check against the full-f32 module semantics (bf16 MXU inputs).
    ref_f32 = jax.block_until_ready(
        _reference(x, weight, bias, precision=jax.lax.Precision.HIGHEST))
    np.testing.assert_allclose(np.asarray(out), np.asarray(ref_f32),
                               rtol=5e-2, atol=5e-2)

    print("KERNEL_OK")
</pallas_src>

<mosaic_0001>
module attributes {stable_mosaic.version = 11 : i64} {
  func.func @_conv_kernel(%arg0: i32, %arg1: memref<1x36x256xbf16, #tpu.memory_space<vmem>>, %arg2: memref<8x36xbf16, #tpu.memory_space<vmem>>, %arg3: memref<8x1xf32, #tpu.memory_space<vmem>>, %arg4: memref<1x8x256xf32, #tpu.memory_space<vmem>>) attributes {dimension_semantics = [#tpu.dimension_semantics<parallel>], iteration_bounds = array<i64: 2>, scalar_prefetch = 0 : i64, scratch_operands = 0 : i64, tpu.core_type = #tpu.core_type<tc>, window_params = [{transform_indices = @transform_0, window_bounds = array<i64: 1, 36, 256>}, {pipeline_mode = #tpu.pipeline_mode<synchronous>, transform_indices = @transform_1, window_bounds = array<i64: 8, 36>}, {pipeline_mode = #tpu.pipeline_mode<synchronous>, transform_indices = @transform_2, window_bounds = array<i64: 8, 1>}, {transform_indices = @transform_3, window_bounds = array<i64: 1, 8, 256>}]} {
    %c0 = arith.constant 0 : index
    %c0_0 = arith.constant 0 : index
    %0 = vector.load %arg2[%c0, %c0_0] : memref<8x36xbf16, #tpu.memory_space<vmem>>, vector<8x36xbf16>
    %c0_1 = arith.constant 0 : index
    %c0_2 = arith.constant 0 : index
    %1 = vector.load %arg3[%c0_1, %c0_2] : memref<8x1xf32, #tpu.memory_space<vmem>>, vector<8x1xf32>
    %c0_3 = arith.constant 0 : index
    %c0_4 = arith.constant 0 : index
    %c0_5 = arith.constant 0 : index
    %2 = vector.load %arg1[%c0_3, %c0_4, %c0_5] : memref<1x36x256xbf16, #tpu.memory_space<vmem>>, vector<1x36x256xbf16>
    %3 = vector.shape_cast %2 : vector<1x36x256xbf16> to vector<36x256xbf16>
    %cst = arith.constant dense<0.000000e+00> : vector<8x256xf32>
    %4 = tpu.matmul %0, %3, %cst {dimension_numbers = #tpu.dot_dimension_numbers<[1], [0], [0], [1], [0, 0, 1, 1], [], []>} : vector<8x36xbf16>, vector<36x256xbf16>, vector<8x256xf32> -> vector<8x256xf32>
    %5 = vector.broadcast %1 : vector<8x1xf32> to vector<8x256xf32>
    %6 = arith.addf %4, %5 : vector<8x256xf32>
    %c0_6 = arith.constant 0 : index
    %c0_7 = arith.constant 0 : index
    %c0_8 = arith.constant 0 : index
    %7 = vector.load %arg4[%c0_6, %c0_7, %c0_8] : memref<1x8x256xf32, #tpu.memory_space<vmem>>, vector<1x8x256xf32>
    %8 = vector.shape_cast %7 : vector<1x8x256xf32> to vector<8x256xf32>
    %9 = vector.shape_cast %6 : vector<8x256xf32> to vector<1x8x256xf32>
    tpu.vector_store %arg4[%c0_6, %c0_7, %c0_8], %9 {strides = array<i32>} : memref<1x8x256xf32, #tpu.memory_space<vmem>>, vector<1x8x256xf32>,
    return
  }
  func.func @transform_0(%arg0: i32) -> (i32, i32, i32) {
    %c0_i32 = arith.constant 0 : i32
    %c0_i32_0 = arith.constant 0 : i32
    %c0_i32_1 = arith.constant 0 : i32
    return %arg0, %c0_i32, %c0_i32_0 : i32, i32, i32
  }
  func.func @transform_1(%arg0: i32) -> (i32, i32) {
    %c0_i32 = arith.constant 0 : i32
    %c0_i32_0 = arith.constant 0 : i32
    %c0_i32_1 = arith.constant 0 : i32
    return %c0_i32, %c0_i32_0 : i32, i32
  }
  func.func @transform_2(%arg0: i32) -> (i32, i32) {
    %c0_i32 = arith.constant 0 : i32
    %c0_i32_0 = arith.constant 0 : i32
    %c0_i32_1 = arith.constant 0 : i32
    return %c0_i32, %c0_i32_0 : i32, i32
  }
  func.func @transform_3(%arg0: i32) -> (i32, i32, i32) {
    %c0_i32 = arith.constant 0 : i32
    %c0_i32_0 = arith.constant 0 : i32
    %c0_i32_1 = arith.constant 0 : i32
    return %arg0, %c0_i32, %c0_i32_0 : i32, i32, i32
  }
}

</mosaic_0001>

<llo_original>
// kernel: tpu_custom_call.1
$region0: #{tpu_custom_call.1}
  #allocation0 [shape = 'u32[]', space=smem, size = 0x4, offset = 0x4, fixed_abs, tag = 'smem constant byte address 0x4 - core index']
  #allocation1 [shape = 'u32[72,128]{1,0:T(1,128)}', space=vmem, size = 0x9000, scoped, tag = 'internal scratch']
  %s0 = inlined_call_operand.vmem [shape: bf16[2,36,256], index: 0, kind: input, shape index: {}]
  %s1 = inlined_call_operand.vmem [shape: bf16[8,36], index: 1, kind: input, shape index: {}]
  %s2 = inlined_call_operand.vmem [shape: f32[8,1], index: 2, kind: input, shape index: {}]
  %s3 = inlined_call_operand.hbm [shape: f32[2,8,256], index: 3, kind: output, shape index: {}]
  %s4 = sld [smem:[#allocation0]]
  $region45: #{tpu_custom_call.1} parent=0
    _
  %s6 = ssub.s32 1, %s4
  %s7 = scalar_select 0, %s6, %s4
  $region1: #{tpu_custom_call.1} parent=0
    #allocation2 [shape = 'u8[16384]{0}', space=vmem, size = 0x4000, scoped, tag = 'output window, operand 0']
    #allocation3 [shape = 's32[2]{0}', space=sflag, size = 0x8, scoped, tag = 'scoped memory for tpu_custom_call.1']
    %8 = vsyncpa [#allocation3], 0
    %s9 = scalar_lea.sflag [#allocation3], 1
    %10 = vsyncpa %s9, 0
    loop: start=0, step=1, limit=4
    $region2: #{tpu_custom_call.1} parent=1 // loop_pre_header
      _
    $region3: #{tpu_custom_call.1} parent=1 // loop_header
      %s12 = sphi 0, %s16
      %p13 = scmp.ge.s32.totalorder %s12, 4
      %s22 = sphi 0, %s24
      %s25 = sphi 0, %s22
      %s26 = sphi 0, %s25
      %s42 = sphi 0, %s26
      %s46 = sphi 0, %s46
      %s48 = sphi 0, %s46
      %s49 = sphi 0, %s48
      %s63 = sphi 0, %s49
      %s67 = sphi 0, %s67
      %s69 = sphi 0, %s67
      %s70 = sphi 0, %s69
      %s84 = sphi 0, %s70
      %s90 = sphi 0, %s92
      %s93 = sphi 0, %s90
      %s94 = sphi 0, %s93
      %s110 = sphi 0, %s94
    $region4: #{tpu_custom_call.1} parent=1 // loop_header_branch
      %15 = sbr.rel (%p13) target = $region8
    $region5: #{tpu_custom_call.1} parent=1 // loop_body
      %s17 = ssub.s32 %s12, 1
      %s18 = ssub.s32 %s12, 2
      %s19 = sadd.s32 %s12, 1
      %s20 = ssub.s32 %s12, %s19
      %p21 = scmp.eq.s32.totalorder %s20, 0
      %s23 = sadd.s32 %s22, 1
      %s24 = scalar_select %p21, %s22, %s23
      %p27 = pneg %p21
      %p28 = scmp.eq.s32.totalorder %s12, 1
      %p29 = por %p27, %p28
      %p30 = scmp.ne.s32.totalorder %s22, %s25
      %p31 = scmp.eq.s32.totalorder %s12, 0
      %p32 = por %p30, %p31
      %p33 = scmp.ne.s32.totalorder %s22, %s25
      %p34 = scmp.eq.s32.totalorder %s17, 1
      %p35 = por %p33, %p34
      %p36 = scmp.ne.s32.totalorder %s25, %s26
      %p37 = scmp.eq.s32.totalorder %s17, 0
      %p38 = por %p36, %p37
      %p39 = scmp.ne.s32.totalorder %s25, %s26
      %p40 = scmp.eq.s32.totalorder %s18, 1
      %p41 = por %p39, %p40
      %p43 = scmp.ne.s32.totalorder %s26, %s42
      %p44 = scmp.eq.s32.totalorder %s18, 0
      %p45 = por %p43, %p44
      %s47 = sadd.s32 %s46, 1
      %p50 = scmp.eq.s32.totalorder %s12, 1
      %p51 = scmp.ne.s32.totalorder %s46, %s48
      %p52 = scmp.eq.s32.totalorder %s12, 0
      %p53 = por %p51, %p52
      %p54 = scmp.ne.s32.totalorder %s46, %s48
      %p55 = scmp.eq.s32.totalorder %s17, 1
      %p56 = por %p54, %p55
      %p57 = scmp.ne.s32.totalorder %s48, %s49
      %p58 = scmp.eq.s32.totalorder %s17, 0
      %p59 = por %p57, %p58
      %p60 = scmp.ne.s32.totalorder %s48, %s49
      %p61 = scmp.eq.s32.totalorder %s18, 1
      %p62 = por %p60, %p61
      %p64 = scmp.ne.s32.totalorder %s49, %s63
      %p65 = scmp.eq.s32.totalorder %s18, 0
      %p66 = por %p64, %p65
      %s68 = sadd.s32 %s67, 1
      %p71 = scmp.eq.s32.totalorder %s12, 1
      %p72 = scmp.ne.s32.totalorder %s67, %s69
      %p73 = scmp.eq.s32.totalorder %s12, 0
      %p74 = por %p72, %p73
      %p75 = scmp.ne.s32.totalorder %s67, %s69
      %p76 = scmp.eq.s32.totalorder %s17, 1
      %p77 = por %p75, %p76
      %p78 = scmp.ne.s32.totalorder %s69, %s70
      %p79 = scmp.eq.s32.totalorder %s17, 0
      %p80 = por %p78, %p79
      %p81 = scmp.ne.s32.totalorder %s69, %s70
      %p82 = scmp.eq.s32.totalorder %s18, 1
      %p83 = por %p81, %p82
      %p85 = scmp.ne.s32.totalorder %s70, %s84
      %p86 = scmp.eq.s32.totalorder %s18, 0
      %p87 = por %p85, %p86
      %s88 = ssub.s32 %s12, %s19
      %p89 = scmp.eq.s32.totalorder %s88, 0
      %s91 = sadd.s32 %s90, 1
      %s92 = scalar_select %p89, %s90, %s91
      %p95 = pneg %p89
      %p96 = scmp.eq.s32.totalorder %s12, 1
      %p97 = por %p95, %p96
      %p98 = scmp.ne.s32.totalorder %s90, %s93
      %p99 = scmp.eq.s32.totalorder %s12, 0
      %p100 = por %p98, %p99
      %p101 = scmp.ne.s32.totalorder %s90, %s93
      %p102 = scmp.eq.s32.totalorder %s17, 1
      %p103 = por %p101, %p102
      %p104 = scmp.ne.s32.totalorder %s93, %s94
      %p105 = scmp.eq.s32.totalorder %s17, 0
      %p106 = por %p104, %p105
      %p107 = scmp.ne.s32.totalorder %s93, %s94
      %p108 = scmp.eq.s32.totalorder %s18, 1
      %p109 = por %p107, %p108
      %p111 = scmp.ne.s32.totalorder %s94, %s110
      %p112 = scmp.eq.s32.totalorder %s18, 0
      %p113 = por %p111, %p112
      %p114 = scmp.le.s32.totalorder 1, %s12
      %p115 = scmp.lt.s32.totalorder %s12, 3
      %p116 = pnand %p114, %p115
      %p117 = pneg %p116
      // Predicated region
      $region9: #{tpu_custom_call.1} parent=5 // pred_check
        _
      $region10: #{tpu_custom_call.1} parent=5 // pred_check_branch
        %119 = sbr.rel (%p116) target = $region12
      $region11: #{tpu_custom_call.1} parent=5 // pred_region
        %s120 = ssub.s32 %s12, 1
        // Predicated region
        $region13: #{tpu_custom_call.1} parent=11 // pred_check
          %p121 = pneg %p59
        $region14: #{tpu_custom_call.1} parent=11 // pred_check_branch
          %123 = sbr.rel (%p121) target = $region16
        $region15: #{tpu_custom_call.1} parent=11 // pred_region
          _
        $region16: #{tpu_custom_call.1} parent=11 // pred_fallthru
          _
        // Predicated region
        $region17: #{tpu_custom_call.1} parent=11 // pred_check
          %p124 = pneg %p80
        $region18: #{tpu_custom_call.1} parent=11 // pred_check_branch
          %126 = sbr.rel (%p124) target = $region20
        $region19: #{tpu_custom_call.1} parent=11 // pred_region
          _
        $region20: #{tpu_custom_call.1} parent=11 // pred_fallthru
          _
      $region12: #{tpu_custom_call.1} parent=5 // pred_fallthru
        _
      %p127 = scmp.lt.s32.totalorder %s12, 2
      // Predicated region
      $region21: #{tpu_custom_call.1} parent=5 // pred_check
        %p128 = pneg %p127
      $region22: #{tpu_custom_call.1} parent=5 // pred_check_branch
        %130 = sbr.rel (%p128) target = $region24
      $region23: #{tpu_custom_call.1} parent=5 // pred_region
        // Predicated region
        $region25: #{tpu_custom_call.1} parent=23 // pred_check
          %p131 = pneg %p32
        $region26: #{tpu_custom_call.1} parent=23 // pred_check_branch
          %133 = sbr.rel (%p131) target = $region28
        $region27: #{tpu_custom_call.1} parent=23 // pred_region
          %p134 = scmp.lt.s32.totalorder %s12, 1
          %s135 = scalar_select %p134, %s12, 1
          %s136 = smul.addr %s135, 10
          %s137 = smul.addr %s136, 4
          %s138 = scalar_lea.vmem %s0, %s137
        $region28: #{tpu_custom_call.1} parent=23 // pred_fallthru
          _
      $region24: #{tpu_custom_call.1} parent=5 // pred_fallthru
        _
      %p139 = scmp.le.s32.totalorder 1, %s12
      %p140 = scmp.lt.s32.totalorder %s12, 3
      %p141 = pnand %p139, %p140
      %p142 = pneg %p141
      // Predicated region
      $region29: #{tpu_custom_call.1} parent=5 // pred_check
        _
      $region30: #{tpu_custom_call.1} parent=5 // pred_check_branch
        %144 = sbr.rel (%p141) target = $region32
      $region31: #{tpu_custom_call.1} parent=5 // pred_region
        %s145 = ssub.s32 %s12, 1
        %p146 = scmp.lt.s32.totalorder %s17, 1
        %s147 = scalar_select %p146, %s17, 1
        %s148 = smul.addr %s147, 10
        %s149 = smul.addr %s148, 4
        %s150 = scalar_lea.vmem %s0, %s149
        %p151 = pneg %p38
        %p152 = pneg %p35
        %p153 = pneg %p59
        %p154 = pneg %p56
        %p155 = pneg %p80
        %p156 = pneg %p77
        %p157 = pneg %p106
        %p158 = pneg %p103
        %s159 = sand.u32 %s93, 1
        %s160 = scalar_lea.sflag [#allocation3], %s159
        %s161 = sand.u32 %s93, 1
        %s162 = smul.addr %s161, 16
        %s163 = scalar_lea.vmem [#allocation2], %s162
        %p164 = scmp.lt.s32.totalorder %s17, 1
        %s165 = scalar_select %p164, %s17, 1
        %s166 = smul.addr %s165, 10
        %s167 = smul.addr %s166, 4
        %s168 = scalar_lea.vmem %s0, %s167
        %v170 = vld [vmem:[%s1] sm:$0xf]
        %v171 = vld [vmem:[%s2] sm:$0xff]
        %v172 = vld [vmem:[%s168] sm:$0xff]
        %v173 = vld [vmem:[%s168 + $0x8] sm:$0xff]
        %v174 = vld [vmem:[%s168 + $0x10] sm:$0xff]
        %v175 = vld [vmem:[%s168 + $0x18] sm:$0xff]
        %v176 = vld [vmem:[%s168 + $0x20] sm:$0x33]
        %178 = vset.pattern.permute.xlu0 0
        %179 = vperm.xlu0 %178, %v171
        %v180 = vpop.permute.xlu0 %179
        %v187 = vunpack.c.l.b16 %v172
        %v188 = vunpack.c.h.b16 %v172
        %v189 = vunpack.c.l.b16 %v173
        %v190 = vunpack.c.h.b16 %v173
        %v191 = vunpack.c.l.b16 %v174
        %v192 = vunpack.c.h.b16 %v174
        %v193 = vunpack.c.l.b16 %v175
        %v194 = vunpack.c.h.b16 %v175
        %v195 = vunpack.c.l.b16 %v176
        %v196 = vunpack.c.h.b16 %v176
        %v197 = vpack.c.b16 %v189, %v187
        %v198 = vpack.c.b16 %v190, %v188
        %v199 = vpack.c.b16 %v193, %v191
        %v200 = vpack.c.b16 %v194, %v192
        %v201 = vpack.c.b16 %v195, %v195
        %v202 = vpack.c.b16 %v196, %v196
        %vm207 = vcmask 293888
        %v209 = vsel %vm207, %v170, 0
        %vm211 = vcmask 1041408
        %v213 = vsel %vm211, %v201, 0
        %v216 = vsel %vm211, %v202, 0
        %218 = vmatpush.bf16.msra.mxu0 0
        %219 = vmatpush.bf16.msra.mxu0 0
        %220 = vmatpush.bf16.msra.mxu0 0
        %221 = vmatpush.bf16.msra.mxu0 0
        %222 = vmatpush.bf16.msra.mxu0 0
        %223 = vmatpush.bf16.msra.mxu0 %v213
        %224 = vmatpush.bf16.msra.mxu0 %v199
        %225 = vmatpush.bf16.msra.mxu0 %v197
        %226 = vmatmul.bf16.gmra.mxu0 %v209
        %v227 = vpop.f32.mrf.mxu0
        %v228 = vadd.f32 %v180, %v227
        %v229 = vpop.f32.mrf.mxu0
        %230 = vdwg.mxu0
        %231 = vmatpush.bf16.msra.mxu0 0
        %232 = vmatpush.bf16.msra.mxu0 0
        %233 = vmatpush.bf16.msra.mxu0 0
        %234 = vmatpush.bf16.msra.mxu0 0
        %235 = vmatpush.bf16.msra.mxu0 0
        %236 = vmatpush.bf16.msra.mxu0 %v216
        %237 = vmatpush.bf16.msra.mxu0 %v200
        %238 = vmatpush.bf16.msra.mxu0 %v198
        %239 = vmatmul.bf16.gmra.mxu0 %v209
        %v240 = vpop.f32.mrf.mxu0
        %v241 = vadd.f32 %v180, %v240
        %v242 = vpop.f32.mrf.mxu0
        %243 = vdwg.mxu0
        %244 = vst [vmem:[%s163] sm:$0xff] %v228
        %245 = vst [vmem:[%s163 + $0x8] sm:$0xff] %v241
        %s246 = sand.u32 %s93, 1
        %s247 = scalar_lea.sflag [#allocation3], %s246
        %s248 = sand.u32 %s93, 1
        %s249 = smul.addr %s248, 16
        %s250 = scalar_lea.vmem [#allocation2], %s249
        // Predicated region
        $region33: #{tpu_custom_call.1} parent=31 // pred_check
          %p251 = pneg %p103
        $region34: #{tpu_custom_call.1} parent=31 // pred_check_branch
          %253 = sbr.rel (%p251) target = $region36
        $region35: #{tpu_custom_call.1} parent=31 // pred_region
          %255 = vsyncadd %s247, 0
          %s256 = smul.addr %s17, 2
          %s257 = smul.addr %s256, 8
          %s258 = scalar_lea.hbm %s3, %s257
          %s260 = sshll.u32 %s250, 4
          %s261 = int_to_ptr.vmem [resolvable:$true] %s260
          %s262 = sshll.u32 %s258, 4
          %s263 = int_to_ptr.hbm [resolvable:$true] %s262
          %265 = dma.vmem_to_hbm [thread:$0]  %s261, 256, %s263, %s247
        $region36: #{tpu_custom_call.1} parent=31 // pred_fallthru
          _
      $region32: #{tpu_custom_call.1} parent=5 // pred_fallthru
        _
      %p266 = scmp.le.s32.totalorder 2, %s12
      // Predicated region
      $region37: #{tpu_custom_call.1} parent=5 // pred_check
        %p267 = pneg %p266
      $region38: #{tpu_custom_call.1} parent=5 // pred_check_branch
        %269 = sbr.rel (%p267) target = $region40
      $region39: #{tpu_custom_call.1} parent=5 // pred_region
        %s270 = ssub.s32 %s12, 2
        // Predicated region
        $region41: #{tpu_custom_call.1} parent=39 // pred_check
          %p271 = pneg %p109
        $region42: #{tpu_custom_call.1} parent=39 // pred_check_branch
          %273 = sbr.rel (%p271) target = $region44
        $region43: #{tpu_custom_call.1} parent=39 // pred_region
          %s274 = sand.u32 %s94, 1
          %s275 = scalar_lea.sflag [#allocation3], %s274
          %s276 = sand.u32 %s94, 1
          %s277 = smul.addr %s276, 16
          %s278 = scalar_lea.vmem [#allocation2], %s277
          %280 = dma.done %s275, 256
        $region44: #{tpu_custom_call.1} parent=39 // pred_fallthru
          _
      $region40: #{tpu_custom_call.1} parent=5 // pred_fallthru
        _
    $region6: #{tpu_custom_call.1} parent=1 // loop_footer
      %s16 = sadd.s32 1, %s12
    $region7: #{tpu_custom_call.1} parent=1 // loop_footer_branch
      %11 = sbr.rel target = $region3
    $region8: #{tpu_custom_call.1} parent=1 // loop_exit
      _
    %281 = vsyncpa [#allocation3], 1
    %s282 = scalar_lea.sflag [#allocation3], 1
    %283 = vsyncpa %s282, 1

</llo_original>
